<compile_context>
chip_gen: v6e
topology: v6e:2x2x1
jax: 0.10.0
libtpu: 0.0.40
codegen_flags: <defaults>
</compile_context>

<pallas_src>
import functools

import jax
import jax.numpy as jnp
from jax.experimental import pallas as pl
from jax.experimental.pallas import tpu as pltpu


def _lrn_across_channels_kernel(x_ref, o_ref, *, local_size, alpha, beta, k):
    # x_ref / o_ref: (C, TILE_W)  -- batch dim is squeezed away by the BlockSpec.
    x = x_ref[...]
    xf = x.astype(jnp.float32)
    x2 = xf * xf

    pad = (local_size - 1) // 2
    c = x2.shape[0]

    # Cross-channel sliding-window sum with zero padding, built from static
    # shifted adds (local_size is a Python constant, typically tiny).
    acc = x2
    for off in range(1, pad + 1):
        if off >= c:
            continue  # neighbors entirely outside the channel range -> zeros
        z = jnp.zeros((off, x2.shape[1]), dtype=x2.dtype)
        acc = acc + jnp.concatenate([x2[off:, :], z], axis=0)        # channel c+off
        acc = acc + jnp.concatenate([z, x2[: c - off, :]], axis=0)   # channel c-off

    # AvgPool divides by the full kernel size (count_include_pad=True).
    base = acc * (alpha / local_size) + k
    div = jnp.power(base, beta)
    o_ref[...] = (xf / div).astype(o_ref.dtype)


def _pick_spatial_tile(hw: int, cap: int = 2048) -> int:
    """Largest multiple-of-128 divisor of hw up to `cap`; else the full extent."""
    best = None
    t = 128
    while t <= min(hw, cap):
        if hw % t == 0:
            best = t
        t += 128
    return best if best is not None else hw


def spatial_cross_map_lrn(x: jax.Array, *, local_size: int = 1, alpha: float = 1.0,
                          beta: float = 0.75, k: float = 1.0) -> jax.Array:
    """Cross-channel LRN for NCHW input, matching the PyTorch module above."""
    assert x.ndim == 4, f"expected NCHW input, got shape {x.shape}"
    assert local_size >= 1 and local_size % 2 == 1, \
        "local_size must be odd (even sizes change the channel count in PyTorch)"

    n, c, h, w = x.shape
    hw = h * w
    tile_w = _pick_spatial_tile(hw)
    grid = (n, hw // tile_w)

    kernel = functools.partial(
        _lrn_across_channels_kernel,
        local_size=int(local_size), alpha=float(alpha), beta=float(beta), k=float(k),
    )

    x3 = x.reshape(n, c, hw)
    out = pl.pallas_call(
        kernel,
        out_shape=jax.ShapeDtypeStruct((n, c, hw), x.dtype),
        grid=grid,
        in_specs=[pl.BlockSpec((pl.Squeezed(), c, tile_w), lambda i, j: (i, 0, j))],
        out_specs=pl.BlockSpec((pl.Squeezed(), c, tile_w), lambda i, j: (i, 0, j)),
        compiler_params=pltpu.CompilerParams(
            dimension_semantics=("parallel", "parallel")),
    )(x3)
    return out.reshape(n, c, h, w)


class SpatialCrossMapLRN:
    """JAX/Pallas port of the PyTorch SpatialCrossMapLRN module."""

    def __init__(self, local_size=1, alpha=1.0, beta=0.75, k=1, ACROSS_CHANNELS=True):
        self.ACROSS_CHANNELS = ACROSS_CHANNELS
        self.local_size = int(local_size)
        self.alpha = float(alpha)
        self.beta = float(beta)
        self.k = float(k)

    def __call__(self, x: jax.Array) -> jax.Array:
        if self.ACROSS_CHANNELS:
            return spatial_cross_map_lrn(
                x, local_size=self.local_size, alpha=self.alpha,
                beta=self.beta, k=self.k)
        # TODO(synk): ACROSS_CHANNELS=False (spatial AvgPool2d of x^2) branch not implemented in Pallas.
        raise NotImplementedError("ACROSS_CHANNELS=False path is not implemented")


if __name__ == "__main__":
    key = jax.random.PRNGKey(0)
    x = jax.random.normal(key, (2, 4, 16, 16), dtype=jnp.float32)

    def lrn_ref(x, local_size, alpha, beta, k):
        xf = x.astype(jnp.float32)
        x2 = xf * xf
        pad = (local_size - 1) // 2
        x2p = jnp.pad(x2, ((0, 0), (pad, pad), (0, 0), (0, 0)))
        c = x.shape[1]
        acc = sum(x2p[:, i:i + c] for i in range(local_size))
        div = (acc / local_size * alpha + k) ** beta
        return (xf / div).astype(x.dtype)

    # Default constructor: local_size=1, alpha=1.0, beta=0.75, k=1.
    m1 = SpatialCrossMapLRN()
    y1 = jax.block_until_ready(m1(x))
    r1 = lrn_ref(x, 1, 1.0, 0.75, 1.0)
    assert y1.shape == x.shape and y1.dtype == x.dtype
    assert bool(jnp.allclose(y1, r1, rtol=1e-5, atol=1e-5)), \
        float(jnp.max(jnp.abs(y1 - r1)))

    # AlexNet-style parameters: exercises the cross-channel window + zero padding.
    m2 = SpatialCrossMapLRN(local_size=5, alpha=1e-4, beta=0.75, k=2.0)
    y2 = jax.block_until_ready(m2(x))
    r2 = lrn_ref(x, 5, 1e-4, 0.75, 2.0)
    assert bool(jnp.allclose(y2, r2, rtol=1e-5, atol=1e-5)), \
        float(jnp.max(jnp.abs(y2 - r2)))

    print("KERNEL_OK")
</pallas_src>

<mosaic_0001>
module attributes {stable_mosaic.version = 11 : i64} {
  func.func @_lrn_across_channels_kernel(%arg0: i32, %arg1: i32, %arg2: memref<1x4x256xf32, #tpu.memory_space<vmem>>, %arg3: memref<1x4x256xf32, #tpu.memory_space<vmem>>) attributes {dimension_semantics = [#tpu.dimension_semantics<parallel>, #tpu.dimension_semantics<parallel>], iteration_bounds = array<i64: 2, 1>, scalar_prefetch = 0 : i64, scratch_operands = 0 : i64, tpu.core_type = #tpu.core_type<tc>, window_params = [{transform_indices = @transform_0, window_bounds = array<i64: 1, 4, 256>}, {transform_indices = @transform_1, window_bounds = array<i64: 1, 4, 256>}]} {
    %c0 = arith.constant 0 : index
    %c0_0 = arith.constant 0 : index
    %c0_1 = arith.constant 0 : index
    %0 = vector.load %arg2[%c0, %c0_0, %c0_1] : memref<1x4x256xf32, #tpu.memory_space<vmem>>, vector<1x4x256xf32>
    %1 = vector.shape_cast %0 : vector<1x4x256xf32> to vector<4x256xf32>
    %2 = arith.mulf %1, %1 : vector<4x256xf32>
    %cst = arith.constant 1.000000e+00 : f32
    %3 = vector.broadcast %cst : f32 to vector<4x256xf32>
    %4 = arith.mulf %2, %3 : vector<4x256xf32>
    %cst_2 = arith.constant 1.000000e+00 : f32
    %5 = vector.broadcast %cst_2 : f32 to vector<4x256xf32>
    %6 = arith.addf %4, %5 : vector<4x256xf32>
    %cst_3 = arith.constant 7.500000e-01 : f32
    %7 = vector.broadcast %cst_3 : f32 to vector<4x256xf32>
    %8 = math.powf %6, %7 : vector<4x256xf32>
    %9 = arith.divf %1, %8 : vector<4x256xf32>
    %c0_4 = arith.constant 0 : index
    %c0_5 = arith.constant 0 : index
    %c0_6 = arith.constant 0 : index
    %10 = vector.load %arg3[%c0_4, %c0_5, %c0_6] : memref<1x4x256xf32, #tpu.memory_space<vmem>>, vector<1x4x256xf32>
    %11 = vector.shape_cast %10 : vector<1x4x256xf32> to vector<4x256xf32>
    %12 = vector.shape_cast %9 : vector<4x256xf32> to vector<1x4x256xf32>
    tpu.vector_store %arg3[%c0_4, %c0_5, %c0_6], %12 {strides = array<i32>} : memref<1x4x256xf32, #tpu.memory_space<vmem>>, vector<1x4x256xf32>,
    return
  }
  func.func @transform_0(%arg0: i32, %arg1: i32) -> (i32, i32, i32) {
    %c0_i32 = arith.constant 0 : i32
    %c0_i32_0 = arith.constant 0 : i32
    return %arg0, %c0_i32, %arg1 : i32, i32, i32
  }
  func.func @transform_1(%arg0: i32, %arg1: i32) -> (i32, i32, i32) {
    %c0_i32 = arith.constant 0 : i32
    %c0_i32_0 = arith.constant 0 : i32
    return %arg0, %c0_i32, %arg1 : i32, i32, i32
  }
}

</mosaic_0001>

<llo_original>
// kernel: tpu_custom_call.1
$region0: #{tpu_custom_call.1}
  #allocation0 [shape = 'u32[]', space=smem, size = 0x4, offset = 0x4, fixed_abs, tag = 'smem constant byte address 0x4 - core index']
  #allocation1 [shape = 'u32[144,128]{1,0:T(1,128)}', space=vmem, size = 0x12000, scoped, tag = 'internal scratch']
  %s0 = inlined_call_operand.hbm [shape: f32[2,4,256], index: 0, kind: input, shape index: {}]
  %s1 = inlined_call_operand.hbm [shape: f32[2,4,256], index: 1, kind: output, shape index: {}]
  %s2 = sld [smem:[#allocation0]]
  $region41: #{tpu_custom_call.1} parent=0
    _
  %s4 = ssub.s32 1, %s2
  %s5 = scalar_select 0, %s4, %s2
  $region1: #{tpu_custom_call.1} parent=0
    #allocation2 [shape = 'u8[8192]{0}', space=vmem, size = 0x2000, scoped, tag = 'input window, operand 0']
    #allocation3 [shape = 's32[2]{0}', space=sflag, size = 0x8, scoped, tag = 'scoped memory for tpu_custom_call.1']
    #allocation4 [shape = 's32[2]{0}', space=sflag, size = 0x8, scoped, tag = 'scoped memory for tpu_custom_call.1']
    #allocation5 [shape = 'u8[8192]{0}', space=vmem, size = 0x2000, scoped, tag = 'output window, operand 0']
    %6 = vsyncpa [#allocation3], 0
    %s7 = scalar_lea.sflag [#allocation3], 1
    %8 = vsyncpa %s7, 0
    %9 = vsyncpa [#allocation4], 0
    %s10 = scalar_lea.sflag [#allocation4], 1
    %11 = vsyncpa %s10, 0
    loop: start=0, step=1, limit=4
    $region2: #{tpu_custom_call.1} parent=1 // loop_pre_header
      _
    $region3: #{tpu_custom_call.1} parent=1 // loop_header
      %s13 = sphi 0, %s17
      %p14 = scmp.ge.s32.totalorder %s13, 4
      %s20 = sphi 0, %s32
      %s21 = sphi 0, %s28
      %s22 = sphi 0, %s20
      %s23 = sphi 0, %s21
      %s24 = sphi 0, %s22
      %s25 = sphi 0, %s23
      %s37 = sphi 0, %s39
      %s40 = sphi 0, %s37
      %s41 = sphi 0, %s40
      %s57 = sphi 0, %s41
      %s65 = sphi 0, %s67
      %s68 = sphi 0, %s65
      %s69 = sphi 0, %s68
      %s85 = sphi 0, %s69
    $region4: #{tpu_custom_call.1} parent=1 // loop_header_branch
      %16 = sbr.rel (%p14) target = $region8
    $region5: #{tpu_custom_call.1} parent=1 // loop_body
      %s18 = ssub.s32 %s13, 1
      %s19 = ssub.s32 %s13, 2
      %s26 = sadd.s32 1, %s21
      %p27 = scmp.ge.s32.totalorder %s26, 1
      %s28 = scalar_select %p27, 0, %s26
      %s29 = sadd.s32 1, %s20
      %s30 = scalar_select %p27, %s29, %s20
      %p31 = scmp.ge.s32.totalorder %s30, 2
      %s32 = scalar_select %p31, 0, %s30
      %s33 = ssub.s32 %s20, %s32
      %s34 = ssub.s32 %s21, %s28
      %s35 = sor.u32 %s33, %s34
      %p36 = scmp.eq.s32.totalorder %s35, 0
      %s38 = sadd.s32 %s37, 1
      %s39 = scalar_select %p36, %s37, %s38
      %p42 = pneg %p36
      %p43 = scmp.eq.s32.totalorder %s13, 1
      %p44 = por %p42, %p43
      %p45 = scmp.ne.s32.totalorder %s37, %s40
      %p46 = scmp.eq.s32.totalorder %s13, 0
      %p47 = por %p45, %p46
      %p48 = scmp.ne.s32.totalorder %s37, %s40
      %p49 = scmp.eq.s32.totalorder %s18, 1
      %p50 = por %p48, %p49
      %p51 = scmp.ne.s32.totalorder %s40, %s41
      %p52 = scmp.eq.s32.totalorder %s18, 0
      %p53 = por %p51, %p52
      %p54 = scmp.ne.s32.totalorder %s40, %s41
      %p55 = scmp.eq.s32.totalorder %s19, 1
      %p56 = por %p54, %p55
      %p58 = scmp.ne.s32.totalorder %s41, %s57
      %p59 = scmp.eq.s32.totalorder %s19, 0
      %p60 = por %p58, %p59
      %s61 = ssub.s32 %s20, %s32
      %s62 = ssub.s32 %s21, %s28
      %s63 = sor.u32 %s61, %s62
      %p64 = scmp.eq.s32.totalorder %s63, 0
      %s66 = sadd.s32 %s65, 1
      %s67 = scalar_select %p64, %s65, %s66
      %p70 = pneg %p64
      %p71 = scmp.eq.s32.totalorder %s13, 1
      %p72 = por %p70, %p71
      %p73 = scmp.ne.s32.totalorder %s65, %s68
      %p74 = scmp.eq.s32.totalorder %s13, 0
      %p75 = por %p73, %p74
      %p76 = scmp.ne.s32.totalorder %s65, %s68
      %p77 = scmp.eq.s32.totalorder %s18, 1
      %p78 = por %p76, %p77
      %p79 = scmp.ne.s32.totalorder %s68, %s69
      %p80 = scmp.eq.s32.totalorder %s18, 0
      %p81 = por %p79, %p80
      %p82 = scmp.ne.s32.totalorder %s68, %s69
      %p83 = scmp.eq.s32.totalorder %s19, 1
      %p84 = por %p82, %p83
      %p86 = scmp.ne.s32.totalorder %s69, %s85
      %p87 = scmp.eq.s32.totalorder %s19, 0
      %p88 = por %p86, %p87
      %p89 = scmp.le.s32.totalorder 1, %s13
      %p90 = scmp.lt.s32.totalorder %s13, 3
      %p91 = pnand %p89, %p90
      %p92 = pneg %p91
      // Predicated region
      $region9: #{tpu_custom_call.1} parent=5 // pred_check
        _
      $region10: #{tpu_custom_call.1} parent=5 // pred_check_branch
        %94 = sbr.rel (%p91) target = $region12
      $region11: #{tpu_custom_call.1} parent=5 // pred_region
        %s95 = ssub.s32 %s13, 1
      $region12: #{tpu_custom_call.1} parent=5 // pred_fallthru
        _
      %p96 = scmp.lt.s32.totalorder %s13, 2
      // Predicated region
      $region13: #{tpu_custom_call.1} parent=5 // pred_check
        %p97 = pneg %p96
      $region14: #{tpu_custom_call.1} parent=5 // pred_check_branch
        %99 = sbr.rel (%p97) target = $region16
      $region15: #{tpu_custom_call.1} parent=5 // pred_region
        // Predicated region
        $region17: #{tpu_custom_call.1} parent=15 // pred_check
          %p100 = pneg %p47
        $region18: #{tpu_custom_call.1} parent=15 // pred_check_branch
          %102 = sbr.rel (%p100) target = $region20
        $region19: #{tpu_custom_call.1} parent=15 // pred_region
          %s103 = sand.u32 %s37, 1
          %s104 = scalar_lea.sflag [#allocation3], %s103
          %s105 = sand.u32 %s37, 1
          %s106 = smul.addr %s105, 8
          %s107 = scalar_lea.vmem [#allocation2], %s106
          %s108 = smul.u32 2, %s21
          %s110 = ssub.s32 128, 128
          %111 = vsyncadd %s104, %s110
          %s112 = smul.addr %s20, 2
          %s113 = sadd.s32 %s108, %s112
          %s114 = smul.addr %s113, 64
          %s115 = scalar_lea.hbm %s0, %s114
          %s117 = sshll.u32 %s107, 4
          %s118 = int_to_ptr.vmem [resolvable:$true] %s117
          %120 = dma.hbm_to_vmem [thread:$0]  %s115, 128, %s118, %s104
        $region20: #{tpu_custom_call.1} parent=15 // pred_fallthru
          _
      $region16: #{tpu_custom_call.1} parent=5 // pred_fallthru
        _
      %p121 = scmp.le.s32.totalorder 1, %s13
      %p122 = scmp.lt.s32.totalorder %s13, 3
      %p123 = pnand %p121, %p122
      %p124 = pneg %p123
      // Predicated region
      $region21: #{tpu_custom_call.1} parent=5 // pred_check
        _
      $region22: #{tpu_custom_call.1} parent=5 // pred_check_branch
        %126 = sbr.rel (%p123) target = $region24
      $region23: #{tpu_custom_call.1} parent=5 // pred_region
        %s127 = ssub.s32 %s13, 1
        %s128 = sand.u32 %s40, 1
        %s129 = scalar_lea.sflag [#allocation3], %s128
        %s130 = sand.u32 %s40, 1
        %s131 = smul.addr %s130, 8
        %s132 = scalar_lea.vmem [#allocation2], %s131
        // Predicated region
        $region25: #{tpu_custom_call.1} parent=23 // pred_check
          %p133 = pneg %p53
        $region26: #{tpu_custom_call.1} parent=23 // pred_check_branch
          %135 = sbr.rel (%p133) target = $region28
        $region27: #{tpu_custom_call.1} parent=23 // pred_region
          %136 = dma.done %s129, 128
        $region28: #{tpu_custom_call.1} parent=23 // pred_fallthru
          _
        %s137 = sand.u32 %s40, 1
        %s138 = scalar_lea.sflag [#allocation3], %s137
        %s139 = sand.u32 %s40, 1
        %s140 = smul.addr %s139, 8
        %s141 = scalar_lea.vmem [#allocation2], %s140
        %p142 = pneg %p53
        %p143 = pneg %p50
        %p144 = pneg %p81
        %p145 = pneg %p78
        %s146 = sand.u32 %s68, 1
        %s147 = scalar_lea.sflag [#allocation4], %s146
        %s148 = sand.u32 %s68, 1
        %s149 = smul.addr %s148, 8
        %s150 = scalar_lea.vmem [#allocation5], %s149
        %s151 = smul.u32 2, %s23
        %s152 = smul.u32 2, %s23
        %v153 = vld [vmem:[%s132] sm:$0xff]
        %v154 = vmul.f32 %v153, %v153
        %v155 = vadd.f32 %v154, 1.0
        %v156 = vpow.f32 %v155, 0.75
        %v157 = vrcp.pop %v156
        %v158 = vmul.f32 %v153, %v157
        %159 = vst [vmem:[%s150] sm:$0xff] %v158
        %s160 = sand.u32 %s68, 1
        %s161 = scalar_lea.sflag [#allocation4], %s160
        %s162 = sand.u32 %s68, 1
        %s163 = smul.addr %s162, 8
        %s164 = scalar_lea.vmem [#allocation5], %s163
        // Predicated region
        $region29: #{tpu_custom_call.1} parent=23 // pred_check
          %p165 = pneg %p78
        $region30: #{tpu_custom_call.1} parent=23 // pred_check_branch
          %167 = sbr.rel (%p165) target = $region32
        $region31: #{tpu_custom_call.1} parent=23 // pred_region
          %s168 = smul.u32 2, %s23
          %s170 = ssub.s32 128, 128
          %171 = vsyncadd %s161, %s170
          %s172 = smul.addr %s22, 2
          %s173 = sadd.s32 %s168, %s172
          %s174 = smul.addr %s173, 64
          %s175 = scalar_lea.hbm %s1, %s174
          %s177 = sshll.u32 %s164, 4
          %s178 = int_to_ptr.vmem [resolvable:$true] %s177
          %180 = dma.vmem_to_hbm [thread:$0]  %s178, 128, %s175, %s161
        $region32: #{tpu_custom_call.1} parent=23 // pred_fallthru
          _
      $region24: #{tpu_custom_call.1} parent=5 // pred_fallthru
        _
      %p181 = scmp.le.s32.totalorder 2, %s13
      // Predicated region
      $region33: #{tpu_custom_call.1} parent=5 // pred_check
        %p182 = pneg %p181
      $region34: #{tpu_custom_call.1} parent=5 // pred_check_branch
        %184 = sbr.rel (%p182) target = $region36
      $region35: #{tpu_custom_call.1} parent=5 // pred_region
        %s185 = ssub.s32 %s13, 2
        // Predicated region
        $region37: #{tpu_custom_call.1} parent=35 // pred_check
          %p186 = pneg %p84
        $region38: #{tpu_custom_call.1} parent=35 // pred_check_branch
          %188 = sbr.rel (%p186) target = $region40
        $region39: #{tpu_custom_call.1} parent=35 // pred_region
          %s189 = sand.u32 %s69, 1
          %s190 = scalar_lea.sflag [#allocation4], %s189
          %s191 = sand.u32 %s69, 1
          %s192 = smul.addr %s191, 8
          %s193 = scalar_lea.vmem [#allocation5], %s192
          %194 = dma.done %s190, 128
        $region40: #{tpu_custom_call.1} parent=35 // pred_fallthru
          _
      $region36: #{tpu_custom_call.1} parent=5 // pred_fallthru
        _
    $region6: #{tpu_custom_call.1} parent=1 // loop_footer
      %s17 = sadd.s32 1, %s13
    $region7: #{tpu_custom_call.1} parent=1 // loop_footer_branch
      %12 = sbr.rel target = $region3
    $region8: #{tpu_custom_call.1} parent=1 // loop_exit
      _
    %195 = vsyncpa [#allocation3], 1
    %s196 = scalar_lea.sflag [#allocation3], 1
    %197 = vsyncpa %s196, 1
    %198 = vsyncpa [#allocation4], 1
    %s199 = scalar_lea.sflag [#allocation4], 1
    %200 = vsyncpa %s199, 1

</llo_original>
